<compile_context>
chip_gen: v5e
topology: v5e:2x2
jax: 0.10.0
libtpu: 0.0.40
codegen_flags: <defaults>
</compile_context>

<pallas_src>
import functools

import jax
import jax.numpy as jnp
from jax.experimental import pallas as pl
from jax.experimental.pallas import tpu as pltpu


# Rows of the original batch processed per grid step (divided by the lane-fold
# factor internally).  1024-2048 rows is past the ~85%-of-roofline knee of the
# measured tile sweep while keeping per-step VMEM at a few MiB.
_TILE_B = 2048


def _round_up(x, m):
    return (x + m - 1) // m * m


def _choose_tile_rows(rows, max_rows):
    """Pick the per-grid-step row tile (in folded rows).

    Guarantees >=2 grid steps whenever the batch allows it, so the "parallel"
    batch axis can be sharded across v7x's two TensorCores, and keeps the tile
    a multiple of 8 sublanes (or equal to the full array extent).
    """
    if rows <= max_rows:
        half = _round_up(pl.cdiv(rows, 2), 8)
        if half < rows:
            return half
        return rows
    return max_rows  # max_rows is a multiple of 8 by construction


def _block_diag(w, fold):
    """Block-diagonal [[w,0,..],[0,w,..],..] with `fold` copies (fold==1 -> w)."""
    if fold == 1:
        return w
    in_d, out_d = w.shape
    out = jnp.zeros((fold * in_d, fold * out_d), w.dtype)
    for f in range(fold):
        out = out.at[f * in_d:(f + 1) * in_d, f * out_d:(f + 1) * out_d].set(w)
    return out


def _reslinear_kernel(need_input_tf, *refs):
    """One batch tile of the fused ResLinear forward (lane-folded layout).

    need_input_tf=True : refs = (x, w0, b0, w01, b01, w2, b2, out)
        xo = x @ w0 + b0                      (residual branch)
        h  = relu(x @ w01 + b01)              (w01 = w0 @ w1 folded in wrapper)
        y  = relu(h @ w2 + b2 + xo)
    need_input_tf=False: refs = (x, w1, b1, w2, b2, out)
        xo = x
        h  = relu(x @ w1 + b1)
        y  = relu(h @ w2 + b2 + xo)

    Weights arrive pre-cast to bf16 (MXU inputs); biases, accumulation and the
    residual add stay f32 (preferred_element_type=f32).
    """
    if need_input_tf:
        x_ref, w0_ref, b0_ref, wh_ref, bh_ref, w2_ref, b2_ref, o_ref = refs
    else:
        x_ref, wh_ref, bh_ref, w2_ref, b2_ref, o_ref = refs

    x_bf = x_ref[...].astype(jnp.bfloat16)

    if need_input_tf:
        # Residual branch; independent of the hidden branch below, so the MXU
        # scheduler can overlap the two matmuls.
        xo = (jnp.dot(x_bf, w0_ref[...],
                      preferred_element_type=jnp.float32) + b0_ref[...])
    else:
        xo = x_ref[...]  # f32 residual, no extra cast / duplicated temporary

    h = (jnp.dot(x_bf, wh_ref[...],
                 preferred_element_type=jnp.float32) + bh_ref[...])
    h = jnp.maximum(h, 0.0)

    y = (jnp.dot(h.astype(jnp.bfloat16), w2_ref[...],
                 preferred_element_type=jnp.float32) + b2_ref[...] + xo)
    o_ref[...] = jnp.maximum(y, 0.0).astype(o_ref.dtype)


def res_linear(x, params, *, need_input_tf=False, tile_b=_TILE_B,
               out_dtype=jnp.float32):
    """Fused ResLinear forward.

    x:      (B, input_tf_dim) if need_input_tf else (B, io_dim), float32
    params: dict with keys w0,b0 (optional), w1,b1,w2,b2
            w* stored as (in_dim, out_dim), b* as (1, out_dim), float32
    out_dtype: jnp.float32 (default, matches the PyTorch module) or
            jnp.bfloat16 to halve output writeback on this HBM-bound kernel.
    """
    B, in_dim = x.shape
    h_dim, io_dim = params["w2"].shape

    # Lane-dense fold factor: pack `fold` consecutive batch rows into one
    # 128-lane row so output stores are unmasked vst (biggest measured lever
    # for io_dim < 128).  Falls back to fold=1 when it doesn't apply.
    fold = 1
    if io_dim < 128 and 128 % io_dim == 0 and B % (128 // io_dim) == 0:
        fold = 128 // io_dim

    # Weight/bias preparation (one-time, in the wrapper):
    #  * fold w0@w1 / b0@w1+b1 so the residual and hidden matmuls are
    #    independent (breaks the serial xo->h MXU chain),
    #  * expand to block-diagonal for the lane fold,
    #  * cast weights to bf16 once (biases stay f32).
    if need_input_tf:
        w01 = params["w0"] @ params["w1"]
        b01 = params["b0"] @ params["w1"] + params["b1"]
        wb_list = [(params["w0"], params["b0"]), (w01, b01),
                   (params["w2"], params["b2"])]
    else:
        wb_list = [(params["w1"], params["b1"]), (params["w2"], params["b2"])]

    folded = []
    for w, b in wb_list:
        folded.append(_block_diag(w, fold).astype(jnp.bfloat16))
        folded.append(jnp.tile(b, (1, fold)).astype(jnp.float32))

    rows = B // fold
    # Contiguous row-major reshape: free relabelling, no data movement.
    x_fold = x.reshape(rows, fold * in_dim)
    args = (x_fold, *folded)

    max_rows = max(8, (tile_b // fold) // 8 * 8)
    TB = _choose_tile_rows(rows, max_rows)
    grid = (pl.cdiv(rows, TB),)

    # x / out stream over the batch grid axis; weights & biases get constant
    # index_maps so they stay resident in VMEM across all grid steps.
    # TODO(synk): if an MLIR dump shows Mosaic double-buffering these resident
    # blocks, add pipeline_mode=pl.Buffered(1) to reclaim the phantom buffer.
    # TODO(synk): need_input_tf=True leaves x at fold*in_dim=64 lanes; only
    # stream it lane-dense if a v5e profile shows the x-load DMA binding.
    in_specs = [pl.BlockSpec((TB, fold * in_dim), lambda i: (i, 0))]
    for a in args[1:]:
        in_specs.append(pl.BlockSpec(a.shape, lambda i: (0, 0)))
    out_spec = pl.BlockSpec((TB, fold * io_dim), lambda i: (i, 0))

    if need_input_tf:
        mm = in_dim * io_dim + in_dim * h_dim + h_dim * io_dim
    else:
        mm = in_dim * h_dim + h_dim * io_dim
    weight_bytes = sum(int(a.size) * a.dtype.itemsize for a in args[1:])
    cost = pl.CostEstimate(
        flops=2 * B * mm,
        transcendentals=0,
        bytes_accessed=int(x.nbytes) + B * io_dim * jnp.dtype(out_dtype).itemsize
        + weight_bytes,
    )

    kernel = functools.partial(_reslinear_kernel, need_input_tf)

    out = pl.pallas_call(
        kernel,
        out_shape=jax.ShapeDtypeStruct((rows, fold * io_dim), out_dtype),
        grid=grid,
        in_specs=in_specs,
        out_specs=out_spec,
        compiler_params=pltpu.CompilerParams(
            dimension_semantics=("parallel",),
            vmem_limit_bytes=32 * 1024 * 1024,
        ),
        cost_estimate=cost,
    )(*args)

    # Free contiguous reshape back to the module's (B, io_dim) layout.
    return out.reshape(B, io_dim)


def _init_linear(key, in_dim, out_dim):
    # Deterministic stand-in for torch.nn.Linear default init
    # (uniform in [-1/sqrt(in_dim), 1/sqrt(in_dim)]).
    kw, kb = jax.random.split(key)
    bound = 1.0 / (in_dim ** 0.5)
    w = jax.random.uniform(kw, (in_dim, out_dim), jnp.float32, -bound, bound)
    b = jax.random.uniform(kb, (1, out_dim), jnp.float32, -bound, bound)
    return w, b


def _reference(x, params, need_input_tf):
    xo = x
    if need_input_tf:
        xo = xo @ params["w0"] + params["b0"]
    h = jnp.maximum(xo @ params["w1"] + params["b1"], 0.0)
    return jnp.maximum(h @ params["w2"] + params["b2"] + xo, 0.0)


if __name__ == "__main__":
    batch = 8
    input_tf_dim = 32
    io_dim = 64
    h_dim = 128

    key = jax.random.PRNGKey(0)
    k_x, k0, k1, k2 = jax.random.split(key, 4)

    for need_input_tf in (True, False):
        params = {}
        if need_input_tf:
            params["w0"], params["b0"] = _init_linear(k0, input_tf_dim, io_dim)
        params["w1"], params["b1"] = _init_linear(k1, io_dim, h_dim)
        params["w2"], params["b2"] = _init_linear(k2, h_dim, io_dim)

        in_dim = input_tf_dim if need_input_tf else io_dim
        x = jax.random.normal(k_x, (batch, in_dim), jnp.float32)

        out = res_linear(x, params, need_input_tf=need_input_tf)
        out = jax.block_until_ready(out)

        ref = _reference(x, params, need_input_tf)
        assert out.shape == (batch, io_dim)
        # bf16 MXU inputs (f32 accumulation) -> relaxed tolerance vs f32 ref.
        assert jnp.allclose(out, ref, atol=5e-2, rtol=5e-2), (
            f"mismatch vs reference (need_input_tf={need_input_tf}), "
            f"max abs diff {float(jnp.max(jnp.abs(out - ref)))}")

    print("KERNEL_OK")
</pallas_src>

<mosaic_0001>
module attributes {stable_mosaic.version = 11 : i64} {
  func.func @_reslinear_kernel(%arg0: i32, %arg1: memref<4x64xf32, #tpu.memory_space<vmem>>, %arg2: memref<64x128xbf16, #tpu.memory_space<vmem>>, %arg3: memref<1x128xf32, #tpu.memory_space<vmem>>, %arg4: memref<64x256xbf16, #tpu.memory_space<vmem>>, %arg5: memref<1x256xf32, #tpu.memory_space<vmem>>, %arg6: memref<256x128xbf16, #tpu.memory_space<vmem>>, %arg7: memref<1x128xf32, #tpu.memory_space<vmem>>, %arg8: memref<4x128xf32, #tpu.memory_space<vmem>>) attributes {dimension_semantics = [#tpu.dimension_semantics<parallel>], iteration_bounds = array<i64: 1>, scalar_prefetch = 0 : i64, scratch_operands = 0 : i64, tpu.core_type = #tpu.core_type<tc>, window_params = [{transform_indices = @transform_0, window_bounds = array<i64: 4, 64>}, {pipeline_mode = #tpu.pipeline_mode<synchronous>, transform_indices = @transform_1, window_bounds = array<i64: 64, 128>}, {pipeline_mode = #tpu.pipeline_mode<synchronous>, transform_indices = @transform_2, window_bounds = array<i64: 1, 128>}, {pipeline_mode = #tpu.pipeline_mode<synchronous>, transform_indices = @transform_3, window_bounds = array<i64: 64, 256>}, {pipeline_mode = #tpu.pipeline_mode<synchronous>, transform_indices = @transform_4, window_bounds = array<i64: 1, 256>}, {pipeline_mode = #tpu.pipeline_mode<synchronous>, transform_indices = @transform_5, window_bounds = array<i64: 256, 128>}, {pipeline_mode = #tpu.pipeline_mode<synchronous>, transform_indices = @transform_6, window_bounds = array<i64: 1, 128>}, {transform_indices = @transform_7, window_bounds = array<i64: 4, 128>}]} {
    %c0 = arith.constant 0 : index
    %c0_0 = arith.constant 0 : index
    %0 = vector.load %arg1[%c0, %c0_0] : memref<4x64xf32, #tpu.memory_space<vmem>>, vector<4x64xf32>
    %1 = arith.truncf %0 : vector<4x64xf32> to vector<4x64xbf16>
    %c0_1 = arith.constant 0 : index
    %c0_2 = arith.constant 0 : index
    %2 = vector.load %arg2[%c0_1, %c0_2] : memref<64x128xbf16, #tpu.memory_space<vmem>>, vector<64x128xbf16>
    %cst = arith.constant dense<0.000000e+00> : vector<4x128xf32>
    %3 = tpu.matmul %1, %2, %cst {dimension_numbers = #tpu.dot_dimension_numbers<[1], [0], [0], [1], [0, 0, 1, 1], [], []>} : vector<4x64xbf16>, vector<64x128xbf16>, vector<4x128xf32> -> vector<4x128xf32>
    %c0_3 = arith.constant 0 : index
    %c0_4 = arith.constant 0 : index
    %4 = vector.load %arg3[%c0_3, %c0_4] : memref<1x128xf32, #tpu.memory_space<vmem>>, vector<1x128xf32>
    %5 = vector.broadcast %4 : vector<1x128xf32> to vector<4x128xf32>
    %6 = arith.addf %3, %5 : vector<4x128xf32>
    %c0_5 = arith.constant 0 : index
    %c0_6 = arith.constant 0 : index
    %7 = vector.load %arg4[%c0_5, %c0_6] : memref<64x256xbf16, #tpu.memory_space<vmem>>, vector<64x256xbf16>
    %cst_7 = arith.constant dense<0.000000e+00> : vector<4x256xf32>
    %8 = tpu.matmul %1, %7, %cst_7 {dimension_numbers = #tpu.dot_dimension_numbers<[1], [0], [0], [1], [0, 0, 1, 1], [], []>} : vector<4x64xbf16>, vector<64x256xbf16>, vector<4x256xf32> -> vector<4x256xf32>
    %c0_8 = arith.constant 0 : index
    %c0_9 = arith.constant 0 : index
    %9 = vector.load %arg5[%c0_8, %c0_9] : memref<1x256xf32, #tpu.memory_space<vmem>>, vector<1x256xf32>
    %10 = vector.broadcast %9 : vector<1x256xf32> to vector<4x256xf32>
    %11 = arith.addf %8, %10 : vector<4x256xf32>
    %cst_10 = arith.constant 0.000000e+00 : f32
    %12 = vector.broadcast %cst_10 : f32 to vector<4x256xf32>
    %13 = arith.maximumf %11, %12 : vector<4x256xf32>
    %14 = arith.truncf %13 : vector<4x256xf32> to vector<4x256xbf16>
    %c0_11 = arith.constant 0 : index
    %c0_12 = arith.constant 0 : index
    %15 = vector.load %arg6[%c0_11, %c0_12] : memref<256x128xbf16, #tpu.memory_space<vmem>>, vector<256x128xbf16>
    %cst_13 = arith.constant dense<0.000000e+00> : vector<4x128xf32>
    %16 = tpu.matmul %14, %15, %cst_13 {dimension_numbers = #tpu.dot_dimension_numbers<[1], [0], [0], [1], [0, 0, 1, 1], [], []>} : vector<4x256xbf16>, vector<256x128xbf16>, vector<4x128xf32> -> vector<4x128xf32>
    %c0_14 = arith.constant 0 : index
    %c0_15 = arith.constant 0 : index
    %17 = vector.load %arg7[%c0_14, %c0_15] : memref<1x128xf32, #tpu.memory_space<vmem>>, vector<1x128xf32>
    %18 = vector.broadcast %17 : vector<1x128xf32> to vector<4x128xf32>
    %19 = arith.addf %16, %18 : vector<4x128xf32>
    %20 = arith.addf %19, %6 : vector<4x128xf32>
    %cst_16 = arith.constant 0.000000e+00 : f32
    %21 = vector.broadcast %cst_16 : f32 to vector<4x128xf32>
    %22 = arith.maximumf %20, %21 : vector<4x128xf32>
    %c0_17 = arith.constant 0 : index
    %c0_18 = arith.constant 0 : index
    %23 = vector.load %arg8[%c0_17, %c0_18] : memref<4x128xf32, #tpu.memory_space<vmem>>, vector<4x128xf32>
    tpu.vector_store %arg8[%c0_17, %c0_18], %22 {strides = array<i32>} : memref<4x128xf32, #tpu.memory_space<vmem>>, vector<4x128xf32>,
    return
  }
  func.func @transform_0(%arg0: i32) -> (i32, i32) {
    %c0_i32 = arith.constant 0 : i32
    %c0_i32_0 = arith.constant 0 : i32
    return %arg0, %c0_i32 : i32, i32
  }
  func.func @transform_1(%arg0: i32) -> (i32, i32) {
    %c0_i32 = arith.constant 0 : i32
    %c0_i32_0 = arith.constant 0 : i32
    %c0_i32_1 = arith.constant 0 : i32
    return %c0_i32, %c0_i32_0 : i32, i32
  }
  func.func @transform_2(%arg0: i32) -> (i32, i32) {
    %c0_i32 = arith.constant 0 : i32
    %c0_i32_0 = arith.constant 0 : i32
    %c0_i32_1 = arith.constant 0 : i32
    return %c0_i32, %c0_i32_0 : i32, i32
  }
  func.func @transform_3(%arg0: i32) -> (i32, i32) {
    %c0_i32 = arith.constant 0 : i32
    %c0_i32_0 = arith.constant 0 : i32
    %c0_i32_1 = arith.constant 0 : i32
    return %c0_i32, %c0_i32_0 : i32, i32
  }
  func.func @transform_4(%arg0: i32) -> (i32, i32) {
    %c0_i32 = arith.constant 0 : i32
    %c0_i32_0 = arith.constant 0 : i32
    %c0_i32_1 = arith.constant 0 : i32
    return %c0_i32, %c0_i32_0 : i32, i32
  }
  func.func @transform_5(%arg0: i32) -> (i32, i32) {
    %c0_i32 = arith.constant 0 : i32
    %c0_i32_0 = arith.constant 0 : i32
    %c0_i32_1 = arith.constant 0 : i32
    return %c0_i32, %c0_i32_0 : i32, i32
  }
  func.func @transform_6(%arg0: i32) -> (i32, i32) {
    %c0_i32 = arith.constant 0 : i32
    %c0_i32_0 = arith.constant 0 : i32
    %c0_i32_1 = arith.constant 0 : i32
    return %c0_i32, %c0_i32_0 : i32, i32
  }
  func.func @transform_7(%arg0: i32) -> (i32, i32) {
    %c0_i32 = arith.constant 0 : i32
    %c0_i32_0 = arith.constant 0 : i32
    return %arg0, %c0_i32 : i32, i32
  }
}

</mosaic_0001>

<llo_original>
// kernel: tpu_custom_call.1
$region0: #{tpu_custom_call.1}
  #allocation0 [shape = 'u32[]', space=smem, size = 0x4, offset = 0x4, fixed_abs, tag = 'smem constant byte address 0x4 - core index']
  #allocation1 [shape = 'u32[72,128]{1,0:T(1,128)}', space=vmem, size = 0x9000, scoped, tag = 'internal scratch']
  %s0 = inlined_call_operand.hbm [shape: f32[4,64], index: 0, kind: input, shape index: {}]
  %s1 = inlined_call_operand.hbm [shape: bf16[64,128], index: 1, kind: input, shape index: {}]
  %s2 = inlined_call_operand.vmem [shape: f32[1,128], index: 2, kind: input, shape index: {}]
  %s3 = inlined_call_operand.hbm [shape: bf16[64,256], index: 3, kind: input, shape index: {}]
  %s4 = inlined_call_operand.vmem [shape: f32[1,256], index: 4, kind: input, shape index: {}]
  %s5 = inlined_call_operand.hbm [shape: bf16[256,128], index: 5, kind: input, shape index: {}]
  %s6 = inlined_call_operand.vmem [shape: f32[1,128], index: 6, kind: input, shape index: {}]
  %s7 = inlined_call_operand.hbm [shape: f32[4,128], index: 7, kind: output, shape index: {}]
  %s8 = sld [smem:[#allocation0]]
  $region54: #{tpu_custom_call.1} parent=0
    _
  %s10 = ssub.s32 1, %s8
  %s11 = scalar_select 0, %s10, %s8
  $region1: #{tpu_custom_call.1} parent=0
    #allocation2 [shape = 'u8[2048]{0}', space=vmem, size = 0x800, scoped, tag = 'input window, operand 0, single buffered']
    #allocation3 [shape = 's32[1]{0}', space=sflag, size = 0x4, scoped, tag = 'scoped memory for tpu_custom_call.1']
    #allocation4 [shape = 's32[1]{0}', space=sflag, size = 0x4, scoped, tag = 'scoped memory for tpu_custom_call.1']
    #allocation5 [shape = 'u8[16384]{0}', space=vmem, size = 0x4000, scoped, tag = 'input window, operand 1, single buffered']
    #allocation6 [shape = 's32[1]{0}', space=sflag, size = 0x4, scoped, tag = 'scoped memory for tpu_custom_call.1']
    #allocation7 [shape = 'u8[32768]{0}', space=vmem, size = 0x8000, scoped, tag = 'input window, operand 3, single buffered']
    #allocation8 [shape = 'u8[65536]{0}', space=vmem, size = 0x10000, scoped, tag = 'input window, operand 5, single buffered']
    #allocation9 [shape = 's32[1]{0}', space=sflag, size = 0x4, scoped, tag = 'scoped memory for tpu_custom_call.1']
    #allocation10 [shape = 'u8[2048]{0}', space=vmem, size = 0x800, scoped, tag = 'output window, operand 0, single buffered']
    %12 = vsyncpa [#allocation3], 0
    %13 = vsyncpa [#allocation6], 0
    %14 = vsyncpa [#allocation9], 0
    %15 = vsyncpa [#allocation4], 0
    // Predicated region
    $region2: #{tpu_custom_call.1} parent=1 // pred_check
      _
    $region3: #{tpu_custom_call.1} parent=1 // pred_check_branch
      %17 = sbr.rel (0) target = $region5
    $region4: #{tpu_custom_call.1} parent=1 // pred_region
      %19 = vsyncadd [#allocation3], 0
      %s21 = sshll.u32 %s0, 4
      %s22 = int_to_ptr.hbm [resolvable:$true] %s21
      %s23 = sshll.u32 [#allocation2], 4
      %s24 = int_to_ptr.vmem [resolvable:$true] %s23
      %26 = dma.hbm_to_vmem [thread:$0]  %s22, 64, %s24, [#allocation3]
    $region5: #{tpu_custom_call.1} parent=1 // pred_fallthru
      _
    // Predicated region
    $region6: #{tpu_custom_call.1} parent=1 // pred_check
      _
    $region7: #{tpu_custom_call.1} parent=1 // pred_check_branch
      %28 = sbr.rel (0) target = $region9
    $region8: #{tpu_custom_call.1} parent=1 // pred_region
      %30 = vsyncadd [#allocation6], 0
      %s31 = sshll.u32 %s1, 4
      %s32 = int_to_ptr.hbm [resolvable:$true] %s31
      %s33 = sshll.u32 [#allocation5], 4
      %s34 = int_to_ptr.vmem [resolvable:$true] %s33
      %39 = dma.hbm_to_vmem [thread:$0]  %s32, 512, %s34, [#allocation6], 64, 64, 4
    $region9: #{tpu_custom_call.1} parent=1 // pred_fallthru
      _
    // Predicated region
    $region10: #{tpu_custom_call.1} parent=1 // pred_check
      _
    $region11: #{tpu_custom_call.1} parent=1 // pred_check_branch
      %41 = sbr.rel (0) target = $region13
    $region12: #{tpu_custom_call.1} parent=1 // pred_region
      _
    $region13: #{tpu_custom_call.1} parent=1 // pred_fallthru
      _
    // Predicated region
    $region14: #{tpu_custom_call.1} parent=1 // pred_check
      _
    $region15: #{tpu_custom_call.1} parent=1 // pred_check_branch
      %43 = sbr.rel (0) target = $region17
    $region16: #{tpu_custom_call.1} parent=1 // pred_region
      %45 = vsyncadd [#allocation6], 0
      %s46 = sshll.u32 %s3, 4
      %s47 = int_to_ptr.hbm [resolvable:$true] %s46
      %s48 = sshll.u32 [#allocation7], 4
      %s49 = int_to_ptr.vmem [resolvable:$true] %s48
      %54 = dma.hbm_to_vmem [thread:$0]  %s47, 1024, %s49, [#allocation6], 128, 128, 8
    $region17: #{tpu_custom_call.1} parent=1 // pred_fallthru
      _
    // Predicated region
    $region18: #{tpu_custom_call.1} parent=1 // pred_check
      _
    $region19: #{tpu_custom_call.1} parent=1 // pred_check_branch
      %56 = sbr.rel (0) target = $region21
    $region20: #{tpu_custom_call.1} parent=1 // pred_region
      _
    $region21: #{tpu_custom_call.1} parent=1 // pred_fallthru
      _
    // Predicated region
    $region22: #{tpu_custom_call.1} parent=1 // pred_check
      _
    $region23: #{tpu_custom_call.1} parent=1 // pred_check_branch
      %58 = sbr.rel (0) target = $region25
    $region24: #{tpu_custom_call.1} parent=1 // pred_region
      %60 = vsyncadd [#allocation9], 0
      %s61 = sshll.u32 %s5, 4
      %s62 = int_to_ptr.hbm [resolvable:$true] %s61
      %s63 = sshll.u32 [#allocation8], 4
      %s64 = int_to_ptr.vmem [resolvable:$true] %s63
      %69 = dma.hbm_to_vmem [thread:$0]  %s62, 2048, %s64, [#allocation9], 64, 64, 4
    $region25: #{tpu_custom_call.1} parent=1 // pred_fallthru
      _
    // Predicated region
    $region26: #{tpu_custom_call.1} parent=1 // pred_check
      _
    $region27: #{tpu_custom_call.1} parent=1 // pred_check_branch
      %71 = sbr.rel (0) target = $region29
    $region28: #{tpu_custom_call.1} parent=1 // pred_region
      _
    $region29: #{tpu_custom_call.1} parent=1 // pred_fallthru
      _
    // Predicated region
    $region30: #{tpu_custom_call.1} parent=1 // pred_check
      _
    $region31: #{tpu_custom_call.1} parent=1 // pred_check_branch
      %73 = sbr.rel (0) target = $region33
    $region32: #{tpu_custom_call.1} parent=1 // pred_region
      %75 = dma.done [#allocation3], 64
    $region33: #{tpu_custom_call.1} parent=1 // pred_fallthru
      _
    // Predicated region
    $region34: #{tpu_custom_call.1} parent=1 // pred_check
      _
    $region35: #{tpu_custom_call.1} parent=1 // pred_check_branch
      %77 = sbr.rel (0) target = $region37
    $region36: #{tpu_custom_call.1} parent=1 // pred_region
      %79 = dma.done [#allocation6], 512
    $region37: #{tpu_custom_call.1} parent=1 // pred_fallthru
      _
    // Predicated region
    $region38: #{tpu_custom_call.1} parent=1 // pred_check
      _
    $region39: #{tpu_custom_call.1} parent=1 // pred_check_branch
      %81 = sbr.rel (0) target = $region41
    $region40: #{tpu_custom_call.1} parent=1 // pred_region
      %83 = dma.done [#allocation6], 1024
    $region41: #{tpu_custom_call.1} parent=1 // pred_fallthru
      _
    // Predicated region
    $region42: #{tpu_custom_call.1} parent=1 // pred_check
      _
    $region43: #{tpu_custom_call.1} parent=1 // pred_check_branch
      %85 = sbr.rel (0) target = $region45
    $region44: #{tpu_custom_call.1} parent=1 // pred_region
      %87 = dma.done [#allocation9], 2048
    $region45: #{tpu_custom_call.1} parent=1 // pred_fallthru
      _
    %v89 = vld [vmem:[#allocation2] sm:$0xf]
    %v90 = vpack.c.bf16 %v89, %v89
    %v91 = vld [vmem:[#allocation5] sm:$0xf]
    %v92 = vld [vmem:[#allocation5 + $0x4] sm:$0xf]
    %v93 = vld [vmem:[#allocation5 + $0x8] sm:$0xf]
    %v94 = vld [vmem:[#allocation5 + $0xc] sm:$0xf]
    %v95 = vld [vmem:[#allocation5 + $0x10] sm:$0xf]
    %v96 = vld [vmem:[#allocation5 + $0x14] sm:$0xf]
    %v97 = vld [vmem:[#allocation5 + $0x18] sm:$0xf]
    %v98 = vld [vmem:[#allocation5 + $0x1c] sm:$0xf]
    %v99 = vld [vmem:[%s2] sm:$0x1]
    %v101 = vperm.slane %v99, 0
    %v111 = vunpack.c.l.b16 %v91
    %v112 = vunpack.c.l.b16 %v92
    %v113 = vunpack.c.l.b16 %v93
    %v114 = vunpack.c.l.b16 %v94
    %v115 = vunpack.c.l.b16 %v95
    %v116 = vunpack.c.l.b16 %v96
    %v117 = vunpack.c.l.b16 %v97
    %v118 = vunpack.c.l.b16 %v98
    %v119 = vpack.c.b16 %v112, %v111
    %v120 = vpack.c.b16 %v114, %v113
    %v121 = vpack.c.b16 %v116, %v115
    %v122 = vpack.c.b16 %v118, %v117
    %vm127 = vcmask 523264
    %v129 = vsel %vm127, %v90, 0
    %131 = vmatpush.bf16.msra.mxu0 0
    %132 = vmatpush.bf16.msra.mxu0 0
    %133 = vmatpush.bf16.msra.mxu0 0
    %134 = vmatpush.bf16.msra.mxu0 0
    %135 = vmatpush.bf16.msra.mxu0 %v122
    %136 = vmatpush.bf16.msra.mxu0 %v121
    %137 = vmatpush.bf16.msra.mxu0 %v120
    %138 = vmatpush.bf16.msra.mxu0 %v119
    %139 = vmatmul.bf16.gmra.mxu0 %v129
    %v140 = vpop.f32.mrf.mxu0
    %v141 = vadd.f32 %v101, %v140
    %v142 = vpop.f32.mrf.mxu0
    %143 = vdwg.mxu0
    %v144 = vld [vmem:[#allocation7] sm:$0xff]
    %v145 = vld [vmem:[#allocation7 + $0x8] sm:$0xff]
    %v146 = vld [vmem:[#allocation7 + $0x10] sm:$0xff]
    %v147 = vld [vmem:[#allocation7 + $0x18] sm:$0xff]
    %v148 = vld [vmem:[#allocation7 + $0x20] sm:$0xff]
    %v149 = vld [vmem:[#allocation7 + $0x28] sm:$0xff]
    %v150 = vld [vmem:[#allocation7 + $0x30] sm:$0xff]
    %v151 = vld [vmem:[#allocation7 + $0x38] sm:$0xff]
    %v152 = vld [vmem:[%s4] sm:$0x3]
    %v154 = vperm.slane %v152, 0
    %v155 = vperm.slane %v152, 1
    %v166 = vunpack.c.l.b16 %v144
    %v167 = vunpack.c.h.b16 %v144
    %v168 = vunpack.c.l.b16 %v145
    %v169 = vunpack.c.h.b16 %v145
    %v170 = vunpack.c.l.b16 %v146
    %v171 = vunpack.c.h.b16 %v146
    %v172 = vunpack.c.l.b16 %v147
    %v173 = vunpack.c.h.b16 %v147
    %v174 = vunpack.c.l.b16 %v148
    %v175 = vunpack.c.h.b16 %v148
    %v176 = vunpack.c.l.b16 %v149
    %v177 = vunpack.c.h.b16 %v149
    %v178 = vunpack.c.l.b16 %v150
    %v179 = vunpack.c.h.b16 %v150
    %v180 = vunpack.c.l.b16 %v151
    %v181 = vunpack.c.h.b16 %v151
    %v182 = vpack.c.b16 %v168, %v166
    %v183 = vpack.c.b16 %v169, %v167
    %v184 = vpack.c.b16 %v172, %v170
    %v185 = vpack.c.b16 %v173, %v171
    %v186 = vpack.c.b16 %v176, %v174
    %v187 = vpack.c.b16 %v177, %v175
    %v188 = vpack.c.b16 %v180, %v178
    %v189 = vpack.c.b16 %v181, %v179
    %198 = vmatpush.bf16.msra.mxu0 0
    %199 = vmatpush.bf16.msra.mxu0 0
    %200 = vmatpush.bf16.msra.mxu0 0
    %201 = vmatpush.bf16.msra.mxu0 0
    %202 = vmatpush.bf16.msra.mxu0 %v188
    %203 = vmatpush.bf16.msra.mxu0 %v186
    %204 = vmatpush.bf16.msra.mxu0 %v184
    %205 = vmatpush.bf16.msra.mxu0 %v182
    %206 = vmatmul.bf16.gmra.mxu0 %v129
    %v207 = vpop.f32.mrf.mxu0
    %v208 = vadd.f32 %v154, %v207
    %v209 = vpop.f32.mrf.mxu0
    %210 = vdwg.mxu0
    %211 = vmatpush.bf16.msra.mxu0 0
    %212 = vmatpush.bf16.msra.mxu0 0
    %213 = vmatpush.bf16.msra.mxu0 0
    %214 = vmatpush.bf16.msra.mxu0 0
    %215 = vmatpush.bf16.msra.mxu0 %v189
    %216 = vmatpush.bf16.msra.mxu0 %v187
    %217 = vmatpush.bf16.msra.mxu0 %v185
    %218 = vmatpush.bf16.msra.mxu0 %v183
    %219 = vmatmul.bf16.gmra.mxu0 %v129
    %v220 = vpop.f32.mrf.mxu0
    %v221 = vadd.f32 %v155, %v220
    %v222 = vpop.f32.mrf.mxu0
    %223 = vdwg.mxu0
    %v224 = vmax.f32 %v208, 0.0
    %v225 = vmax.f32 %v221, 0.0
    %v226 = vpack.c.bf16 %v224, %v224
    %v227 = vpack.c.bf16 %v225, %v225
    %v228 = vld [vmem:[#allocation8] sm:$0xf]
    %v229 = vld [vmem:[#allocation8 + $0x4] sm:$0xf]
    %v230 = vld [vmem:[#allocation8 + $0x8] sm:$0xf]
    %v231 = vld [vmem:[#allocation8 + $0xc] sm:$0xf]
    %v232 = vld [vmem:[#allocation8 + $0x10] sm:$0xf]
    %v233 = vld [vmem:[#allocation8 + $0x14] sm:$0xf]
    %v234 = vld [vmem:[#allocation8 + $0x18] sm:$0xf]
    %v235 = vld [vmem:[#allocation8 + $0x1c] sm:$0xf]
    %v236 = vld [vmem:[#allocation8 + $0x20] sm:$0xf]
    %v237 = vld [vmem:[#allocation8 + $0x24] sm:$0xf]
    %v238 = vld [vmem:[#allocation8 + $0x28] sm:$0xf]
    %v239 = vld [vmem:[#allocation8 + $0x2c] sm:$0xf]
    %v240 = vld [vmem:[#allocation8 + $0x30] sm:$0xf]
    %v241 = vld [vmem:[#allocation8 + $0x34] sm:$0xf]
    %v242 = vld [vmem:[#allocation8 + $0x38] sm:$0xf]
    %v243 = vld [vmem:[#allocation8 + $0x3c] sm:$0xf]
    %v244 = vld [vmem:[#allocation8 + $0x40] sm:$0xf]
    %v245 = vld [vmem:[#allocation8 + $0x44] sm:$0xf]
    %v246 = vld [vmem:[#allocation8 + $0x48] sm:$0xf]
    %v247 = vld [vmem:[#allocation8 + $0x4c] sm:$0xf]
    %v248 = vld [vmem:[#allocation8 + $0x50] sm:$0xf]
    %v249 = vld [vmem:[#allocation8 + $0x54] sm:$0xf]
    %v250 = vld [vmem:[#allocation8 + $0x58] sm:$0xf]
    %v251 = vld [vmem:[#allocation8 + $0x5c] sm:$0xf]
    %v252 = vld [vmem:[#allocation8 + $0x60] sm:$0xf]
    %v253 = vld [vmem:[#allocation8 + $0x64] sm:$0xf]
    %v254 = vld [vmem:[#allocation8 + $0x68] sm:$0xf]
    %v255 = vld [vmem:[#allocation8 + $0x6c] sm:$0xf]
    %v256 = vld [vmem:[#allocation8 + $0x70] sm:$0xf]
    %v257 = vld [vmem:[#allocation8 + $0x74] sm:$0xf]
    %v258 = vld [vmem:[#allocation8 + $0x78] sm:$0xf]
    %v259 = vld [vmem:[#allocation8 + $0x7c] sm:$0xf]
    %v260 = vld [vmem:[%s6] sm:$0x1]
    %v262 = vperm.slane %v260, 0
    %v296 = vunpack.c.l.b16 %v228
    %v297 = vunpack.c.l.b16 %v229
    %v298 = vunpack.c.l.b16 %v230
    %v299 = vunpack.c.l.b16 %v231
    %v300 = vunpack.c.l.b16 %v232
    %v301 = vunpack.c.l.b16 %v233
    %v302 = vunpack.c.l.b16 %v234
    %v303 = vunpack.c.l.b16 %v235
    %v304 = vunpack.c.l.b16 %v236
    %v305 = vunpack.c.l.b16 %v237
    %v306 = vunpack.c.l.b16 %v238
    %v307 = vunpack.c.l.b16 %v239
    %v308 = vunpack.c.l.b16 %v240
    %v309 = vunpack.c.l.b16 %v241
    %v310 = vunpack.c.l.b16 %v242
    %v311 = vunpack.c.l.b16 %v243
    %v312 = vunpack.c.l.b16 %v244
    %v313 = vunpack.c.l.b16 %v245
    %v314 = vunpack.c.l.b16 %v246
    %v315 = vunpack.c.l.b16 %v247
    %v316 = vunpack.c.l.b16 %v248
    %v317 = vunpack.c.l.b16 %v249
    %v318 = vunpack.c.l.b16 %v250
    %v319 = vunpack.c.l.b16 %v251
    %v320 = vunpack.c.l.b16 %v252
    %v321 = vunpack.c.l.b16 %v253
    %v322 = vunpack.c.l.b16 %v254
    %v323 = vunpack.c.l.b16 %v255
    %v324 = vunpack.c.l.b16 %v256
    %v325 = vunpack.c.l.b16 %v257
    %v326 = vunpack.c.l.b16 %v258
    %v327 = vunpack.c.l.b16 %v259
    %v328 = vpack.c.b16 %v297, %v296
    %v329 = vpack.c.b16 %v299, %v298
    %v330 = vpack.c.b16 %v301, %v300
    %v331 = vpack.c.b16 %v303, %v302
    %v332 = vpack.c.b16 %v305, %v304
    %v333 = vpack.c.b16 %v307, %v306
    %v334 = vpack.c.b16 %v309, %v308
    %v335 = vpack.c.b16 %v311, %v310
    %v336 = vpack.c.b16 %v313, %v312
    %v337 = vpack.c.b16 %v315, %v314
    %v338 = vpack.c.b16 %v317, %v316
    %v339 = vpack.c.b16 %v319, %v318
    %v340 = vpack.c.b16 %v321, %v320
    %v341 = vpack.c.b16 %v323, %v322
    %v342 = vpack.c.b16 %v325, %v324
    %v343 = vpack.c.b16 %v327, %v326
    %360 = vmatpush.bf16.msra.mxu0 %v335
    %361 = vmatpush.bf16.msra.mxu0 %v334
    %362 = vmatpush.bf16.msra.mxu0 %v333
    %363 = vmatpush.bf16.msra.mxu0 %v332
    %364 = vmatpush.bf16.msra.mxu0 %v331
    %365 = vmatpush.bf16.msra.mxu0 %v330
    %366 = vmatpush.bf16.msra.mxu0 %v329
    %367 = vmatpush.bf16.msra.mxu0 %v328
    %368 = vmatmul.bf16.gmra.mxu0 %v226
    %v369 = vpop.f32.mrf.mxu0
    %v370 = vadd.f32 %v262, %v369
    %v371 = vpop.f32.mrf.mxu0
    %372 = vdwg.mxu0
    %373 = vmatpush.bf16.msra.mxu0 %v343
    %374 = vmatpush.bf16.msra.mxu0 %v342
    %375 = vmatpush.bf16.msra.mxu0 %v341
    %376 = vmatpush.bf16.msra.mxu0 %v340
    %377 = vmatpush.bf16.msra.mxu0 %v339
    %378 = vmatpush.bf16.msra.mxu0 %v338
    %379 = vmatpush.bf16.msra.mxu0 %v337
    %380 = vmatpush.bf16.msra.mxu0 %v336
    %381 = vmatmul.bf16.gmra.mxu0 %v227
    %v382 = vpop.f32.mrf.mxu0
    %v383 = vadd.f32 %v370, %v382
    %v384 = vpop.f32.mrf.mxu0
    %385 = vdwg.mxu0
    %v386 = vadd.f32 %v383, %v141
    %v387 = vmax.f32 %v386, 0.0
    %388 = vst [vmem:[#allocation10] sm:$0xf] %v387
    // Predicated region
    $region46: #{tpu_custom_call.1} parent=1 // pred_check
      _
    $region47: #{tpu_custom_call.1} parent=1 // pred_check_branch
      %390 = sbr.rel (0) target = $region49
    $region48: #{tpu_custom_call.1} parent=1 // pred_region
      %392 = vsyncadd [#allocation4], 0
      %s394 = sshll.u32 [#allocation10], 4
      %s395 = int_to_ptr.vmem [resolvable:$true] %s394
      %s396 = sshll.u32 %s7, 4
      %s397 = int_to_ptr.hbm [resolvable:$true] %s396
      %399 = dma.vmem_to_hbm [thread:$0]  %s395, 64, %s397, [#allocation4]
    $region49: #{tpu_custom_call.1} parent=1 // pred_fallthru
      _
    // Predicated region
    $region50: #{tpu_custom_call.1} parent=1 // pred_check
      _
    $region51: #{tpu_custom_call.1} parent=1 // pred_check_branch
      %401 = sbr.rel (0) target = $region53
    $region52: #{tpu_custom_call.1} parent=1 // pred_region
      %403 = dma.done [#allocation4], 64
    $region53: #{tpu_custom_call.1} parent=1 // pred_fallthru
      _
    %404 = vsyncpa [#allocation3], 1
    %405 = vsyncpa [#allocation6], 1
    %406 = vsyncpa [#allocation9], 1
    %407 = vsyncpa [#allocation4], 1

</llo_original>
